<compile_context>
chip_gen: v7x
topology: tpu7x:2x2x1
jax: 0.10.0
libtpu: 0.0.40
codegen_flags: <defaults>
</compile_context>

<pallas_src>
import math
import functools

import jax
import jax.numpy as jnp
from jax.experimental import pallas as pl
from jax.experimental.pallas import tpu as pltpu


def _round_up(n: int, m: int) -> int:
    return ((n + m - 1) // m) * m


def _round_down(n: int, m: int) -> int:
    return (n // m) * m


@functools.lru_cache(maxsize=None)
def _div_term(half_dim: int):
    """Deterministic frequency table (the torch module's registered buffer)."""
    div_exp = math.log(10000.0) / (half_dim - 1)
    dt = jnp.exp(jnp.arange(half_dim, dtype=jnp.float32) * (-div_exp))
    return dt.reshape(1, half_dim)                      # [1, half_dim]


def _step_embedding_kernel(x_ref, div_ref, out_ref, *, scale, half_dim, split_store):
    # x_ref:   [TB, 1]          float32 timesteps for this batch tile
    # div_ref: [1, half_dim]    float32 frequency table (grid-invariant)
    # out_ref: [TB, 2*half_dim] output tile
    #
    # (scale * x) first == the PyTorch ordering `(scale * x[:, None]) * div_term`;
    # it is a per-row multiply (TB elems), not a per-output-element one.
    t = (scale * x_ref[...]) * div_ref[...]             # [TB, half_dim]
    if split_store:
        # half_dim is a multiple of 128: both slice stores are 128-lane-aligned
        # unmasked vst; avoids materializing the concatenated [TB, emb] temp.
        out_ref[:, :half_dim] = jnp.sin(t).astype(out_ref.dtype)
        out_ref[:, half_dim:] = jnp.cos(t).astype(out_ref.dtype)
    else:
        # half_dim < 128: one full-width store beats two sub-128-lane masked
        # stores; the concat (XLU) hides under the VPU sin/cos work.
        out_ref[...] = jnp.concatenate(
            [jnp.sin(t), jnp.cos(t)], axis=-1).astype(out_ref.dtype)


def step_embedding(x, embedding_dim: int, scale: float = 1000.0,
                   block_b: int | None = None,
                   out_dtype=jnp.float32,
                   vmem_budget_bytes: int = 8 * 1024 * 1024):
    """Pallas implementation of Step_Embedding.forward.

    x: [B] float array of timesteps.
    returns: [B, embedding_dim] == concat([sin, cos], axis=1).
    """
    assert embedding_dim % 2 == 0
    # half_dim - 1 == 0 would divide by zero (same hazard as the torch module).
    assert embedding_dim >= 4
    half_dim = embedding_dim // 2
    B = x.shape[0]

    # Sublane granularity for the output dtype (f32: 8, bf16: 16, fp8: 32).
    sub = max(8, 32 // jnp.dtype(out_dtype).itemsize)

    # Batch tile from a VMEM budget: the double-buffered output block
    # (2 * tb * emb * 4B) plus elementwise intermediates (~2x more) dominate;
    # 8 MiB keeps us far inside v7x's 32 MiB scoped default while still giving
    # large tiles (>= 512 rows for emb <= 1024) on v5e/v6e at large B.
    tb = _round_down(vmem_budget_bytes // (4 * embedding_dim * 4), sub)
    tb = max(sub, min(tb, 1024))
    if block_b is not None:
        tb = max(sub, _round_up(min(block_b, tb), sub))
    tb = min(tb, _round_up(B, sub))                      # single tile for tiny B

    x2d = x.astype(jnp.float32).reshape(B, 1)            # [B, 1]
    div2d = _div_term(half_dim)                          # [1, half_dim]

    kernel = functools.partial(
        _step_embedding_kernel,
        scale=float(scale),
        half_dim=half_dim,
        split_store=(half_dim % 128 == 0),
    )

    # No pad/slice: Pallas masks the ragged last block's OOB rows on writeback,
    # so the output is written exactly once, straight into its final buffer.
    return pl.pallas_call(
        kernel,
        out_shape=jax.ShapeDtypeStruct((B, embedding_dim), out_dtype),
        grid=(pl.cdiv(B, tb),),
        in_specs=[
            pl.BlockSpec((tb, 1), lambda i: (i, 0)),          # timestep column tile
            pl.BlockSpec((1, half_dim), lambda i: (0, 0)),    # freq table (invariant)
        ],
        out_specs=pl.BlockSpec((tb, embedding_dim), lambda i: (i, 0)),
        compiler_params=pltpu.CompilerParams(
            # Independent batch tiles: megacore sharding on multi-TC parts.
            dimension_semantics=("parallel",),
        ),
    )(x2d, div2d)


def _reference(x, embedding_dim: int, scale: float = 1000.0):
    """Pure-JAX reference mirroring the PyTorch forward exactly."""
    half_dim = embedding_dim // 2
    div_exp = math.log(10000.0) / (half_dim - 1)
    div_term = jnp.exp(jnp.arange(half_dim, dtype=jnp.float32) * (-div_exp))
    t = scale * x.astype(jnp.float32)[:, None] * div_term[None]
    return jnp.concatenate([jnp.sin(t), jnp.cos(t)], axis=1)


if __name__ == "__main__":
    scale = 1000.0
    # NOTE on tolerance: with scale=1000 the sin/cos arguments reach ~1e3; f32
    # range reduction may differ in the low bits between the Mosaic kernel and
    # the XLA reference, so we compare at 1e-4 rather than 1e-5.
    ATOL = 1e-4
    RTOL = 1e-4

    # Case 1: small single-tile batch (typical diffusion timestep batch),
    # half_dim < 128 -> concat store path.
    B1, emb1 = 8, 64
    x1 = jax.random.uniform(jax.random.PRNGKey(0), (B1,), dtype=jnp.float32)
    out1 = jax.block_until_ready(step_embedding(x1, emb1, scale))
    assert out1.shape == (B1, emb1)
    assert jnp.allclose(out1, _reference(x1, emb1, scale), atol=ATOL, rtol=RTOL), \
        "mismatch (case 1)"

    # Case 2: ragged batch grid (B=20, tile=8 -> grid=3, masked last block).
    B2, emb2 = 20, 64
    x2 = jax.random.uniform(jax.random.PRNGKey(1), (B2,), dtype=jnp.float32)
    out2 = jax.block_until_ready(step_embedding(x2, emb2, scale, block_b=8))
    assert out2.shape == (B2, emb2)
    assert jnp.allclose(out2, _reference(x2, emb2, scale), atol=ATOL, rtol=RTOL), \
        "mismatch (case 2 / ragged writeback)"

    # Case 3: half_dim % 128 == 0 -> two lane-aligned slice stores (no concat).
    B3, emb3 = 16, 256
    x3 = jax.random.uniform(jax.random.PRNGKey(2), (B3,), dtype=jnp.float32)
    out3 = jax.block_until_ready(step_embedding(x3, emb3, scale))
    assert out3.shape == (B3, emb3)
    assert jnp.allclose(out3, _reference(x3, emb3, scale), atol=ATOL, rtol=RTOL), \
        "mismatch (case 3 / split-store path)"

    print("KERNEL_OK")
</pallas_src>

<mosaic_0001>
module attributes {stable_mosaic.version = 11 : i64} {
  func.func @_step_embedding_kernel(%arg0: i32, %arg1: memref<8x1xf32, #tpu.memory_space<vmem>>, %arg2: memref<1x32xf32, #tpu.memory_space<vmem>>, %arg3: memref<8x64xf32, #tpu.memory_space<vmem>>) attributes {dimension_semantics = [#tpu.dimension_semantics<parallel>], iteration_bounds = array<i64: 1>, scalar_prefetch = 0 : i64, scratch_operands = 0 : i64, tpu.core_type = #tpu.core_type<tc>, window_params = [{transform_indices = @transform_0, window_bounds = array<i64: 8, 1>}, {pipeline_mode = #tpu.pipeline_mode<synchronous>, transform_indices = @transform_1, window_bounds = array<i64: 1, 32>}, {transform_indices = @transform_2, window_bounds = array<i64: 8, 64>}]} {
    %c0 = arith.constant 0 : index
    %c0_0 = arith.constant 0 : index
    %0 = vector.load %arg1[%c0, %c0_0] : memref<8x1xf32, #tpu.memory_space<vmem>>, vector<8x1xf32>
    %cst = arith.constant 1.000000e+03 : f32
    %1 = vector.broadcast %cst : f32 to vector<8x1xf32>
    %2 = arith.mulf %1, %0 : vector<8x1xf32>
    %c0_1 = arith.constant 0 : index
    %c0_2 = arith.constant 0 : index
    %3 = vector.load %arg2[%c0_1, %c0_2] : memref<1x32xf32, #tpu.memory_space<vmem>>, vector<1x32xf32>
    %4 = vector.broadcast %2 : vector<8x1xf32> to vector<8x32xf32>
    %5 = vector.broadcast %3 : vector<1x32xf32> to vector<8x32xf32>
    %6 = arith.mulf %4, %5 : vector<8x32xf32>
    %7 = math.sin %6 : vector<8x32xf32>
    %8 = math.cos %6 : vector<8x32xf32>
    %9 = tpu.concatenate %7, %8 in 1 : vector<8x32xf32>, vector<8x32xf32> -> vector<8x64xf32>
    %c0_3 = arith.constant 0 : index
    %c0_4 = arith.constant 0 : index
    %10 = vector.load %arg3[%c0_3, %c0_4] : memref<8x64xf32, #tpu.memory_space<vmem>>, vector<8x64xf32>
    tpu.vector_store %arg3[%c0_3, %c0_4], %9 {strides = array<i32>} : memref<8x64xf32, #tpu.memory_space<vmem>>, vector<8x64xf32>,
    return
  }
  func.func @transform_0(%arg0: i32) -> (i32, i32) {
    %c0_i32 = arith.constant 0 : i32
    %c0_i32_0 = arith.constant 0 : i32
    return %arg0, %c0_i32 : i32, i32
  }
  func.func @transform_1(%arg0: i32) -> (i32, i32) {
    %c0_i32 = arith.constant 0 : i32
    %c0_i32_0 = arith.constant 0 : i32
    %c0_i32_1 = arith.constant 0 : i32
    return %c0_i32, %c0_i32_0 : i32, i32
  }
  func.func @transform_2(%arg0: i32) -> (i32, i32) {
    %c0_i32 = arith.constant 0 : i32
    %c0_i32_0 = arith.constant 0 : i32
    return %arg0, %c0_i32 : i32, i32
  }
}

</mosaic_0001>

<llo_original>
// kernel: tpu_custom_call.1
$region0: #{tpu_custom_call.1}
  #allocation0 [shape = 'u32[]', space=smem, size = 0x4, offset = 0x4, fixed_abs, tag = 'smem constant byte address 0x4 - core index']
  #allocation1 [shape = 'u32[144,128]{1,0:T(1,128)}', space=vmem, size = 0x12000, scoped, tag = 'internal scratch']
  %s0 = inlined_call_operand.vmem [shape: f32[8,1], index: 0, kind: input, shape index: {}]
  %s1 = inlined_call_operand.vmem [shape: f32[1,32], index: 1, kind: input, shape index: {}]
  %s2 = inlined_call_operand.hbm [shape: f32[8,64], index: 2, kind: output, shape index: {}]
  %s3 = sld [smem:[#allocation0]]
  $region18: #{tpu_custom_call.1} parent=0
    _
  %s5 = ssub.s32 1, %s3
  %s6 = scalar_select 0, %s5, %s3
  $region1: #{tpu_custom_call.1} parent=0
    #allocation2 [shape = 'u8[4096]{0}', space=vmem, size = 0x1000, scoped, tag = 'output window, operand 0, single buffered']
    #allocation3 [shape = 's32[1]{0}', space=sflag, size = 0x4, scoped, tag = 'scoped memory for tpu_custom_call.1']
    %7 = vsyncpa [#allocation3], 0
    // Predicated region
    $region2: #{tpu_custom_call.1} parent=1 // pred_check
      _
    $region3: #{tpu_custom_call.1} parent=1 // pred_check_branch
      %9 = sbr.rel (0) target = $region5
    $region4: #{tpu_custom_call.1} parent=1 // pred_region
      _
    $region5: #{tpu_custom_call.1} parent=1 // pred_fallthru
      _
    // Predicated region
    $region6: #{tpu_custom_call.1} parent=1 // pred_check
      _
    $region7: #{tpu_custom_call.1} parent=1 // pred_check_branch
      %11 = sbr.rel (0) target = $region9
    $region8: #{tpu_custom_call.1} parent=1 // pred_region
      _
    $region9: #{tpu_custom_call.1} parent=1 // pred_fallthru
      _
    %v12 = vld [vmem:[%s0] sm:$0xff]
    %v13 = vmul.f32 %v12, 1000.0
    %v14 = vld [vmem:[%s1] sm:$0x1]
    %16 = vset.pattern.permute.xlu0 0
    %17 = vperm.xlu0 %16, %v13
    %v18 = vpop.permute.xlu0 %17
    %v21 = vlaneseq
    %v22 = vshrl.u32 %v21, 7
    %v23 = vsub.s32 0, %v22
    %v24 = vrot.slane %v14, %v23
    %v26 = vmul.f32 %v18, %v24
    %v27 = vand.u32 2147483647, %v26
    %vm28 = vcmp.le.f32.partialorder %v27, 0.7853982
    %vm29 = vcmp.lt.s32.totalorder %v26, 0
    %v30 = vand.u32 %v26, 2139095040
    %v31 = vshrl.u32 %v30, 23
    %v32 = vsub.s32 %v31, 127
    %v33 = vand.u32 2147483647, %v26
    %v34 = vand.u32 %v33, 8388607
    %v35 = vor.u32 %v34, 8388608
    %v36 = vsub.s32 0, %v35
    %v37 = vadd.s32 %v32, 1
    %vm38 = vcmp.gt.s32.totalorder %v37, 0
    %v39 = vsel %vm38, %v37, 0
    %v40 = vshrl.u32 %v39, 5
    %v41 = vand.u32 %v39, 31
    %v42 = vsub.s32 32, %v41
    %v43 = vshrl.u32 683565275, %v42
    %v44 = vshll.u32 683565275, %v41
    %v45 = vshrl.u32 2475754826, %v42
    %v46 = vor.u32 %v44, %v45
    %v47 = vshll.u32 2475754826, %v41
    %v48 = vshrl.u32 2131351028, %v42
    %v49 = vor.u32 %v47, %v48
    %v50 = vshll.u32 2131351028, %v41
    %v51 = vshrl.u32 2102212464, %v42
    %v52 = vor.u32 %v50, %v51
    %v53 = vshll.u32 2102212464, %v41
    %v54 = vshrl.u32 920167782, %v42
    %v55 = vor.u32 %v53, %v54
    %v56 = vshll.u32 920167782, %v41
    %v57 = vshrl.u32 1326507024, %v42
    %v58 = vor.u32 %v56, %v57
    %vm59 = vcmp.lt.s32.totalorder %v40, 1
    %vm60 = vcmp.lt.s32.totalorder %v40, 2
    %vm61 = vcmp.lt.s32.totalorder %v40, 3
    %vm62 = vcmp.lt.s32.totalorder %v40, 4
    %v63 = vsel %vm59, %v43, %v46
    %v64 = vsel %vm62, %v52, 2102212464
    %v65 = vsel %vm61, %v49, %v64
    %v66 = vsel %vm60, %v63, %v65
    %v67 = vsel %vm59, %v46, %v49
    %v68 = vsel %vm62, %v55, 920167782
    %v69 = vsel %vm61, %v52, %v68
    %v70 = vsel %vm60, %v67, %v69
    %v71 = vsel %vm59, %v49, %v52
    %v72 = vsel %vm62, %v58, 1326507024
    %v73 = vsel %vm61, %v55, %v72
    %v74 = vsel %vm60, %v71, %v73
    %v75 = vshll.u32 %v35, 8
    %v76 = vmul.u32.u64.compose %v75, %v74
    %v77 = vextract.low.u32 %v76
    %v78 = vextract.high.u32 %v76
    %v79 = vmul.u32.u64.compose %v75, %v70
    %v80 = vextract.low.u32 %v79
    %v81 = vextract.high.u32 %v79
    %v82 = vmul.u32 %v75, %v66
    %v83 = vadd.s32 %v78, %v80
    %vm84 = vc.u32 %v78, %v80
    %v85 = vadd.s32 %v81, 1
    %v86 = vsel %vm84, %v85, %v81
    %v87 = vadd.s32 %v82, %v86
    %v88 = vadd.s32 %v87, 536870912
    %v89 = vshrl.u32 %v88, 30
    %v90 = vshll.u32 %v89, 30
    %v91 = vsub.s32 %v87, %v90
    %vm92 = vcmp.lt.s32.totalorder %v91, 0
    %v93 = vsub.s32 0, %v91
    %v94 = vsel %vm92, %v93, %v91
    %v95 = vclz %v94
    %v96 = vsub.s32 %v95, 2
    %vm97 = vcmp.gt.s32.totalorder 0, %v96
    %v98 = vsel %vm97, 0, %v96
    %v99 = vsub.s32 32, %v98
    %v100 = vshll.u32 %v91, %v98
    %v101 = vshrl.u32 %v83, %v99
    %v102 = vor.u32 %v100, %v101
    %v103 = vsub.s32 4294967266, %v98
    %v104 = vadd.s32 %v103, 127
    %v105 = vshll.u32 %v104, 23
    %v106 = vor.u32 4788187, %v105
    %v107 = vand.u32 2147483647, %v106
    %v109 = vcvt.s32.f32 %v102
    %v110 = vmul.f32 %v109, %v107
    %v111 = vxor.u32 %v110, 2147483648
    %v112 = vsel %vm29, %v111, %v110
    %v113 = vsub.s32 4, %v89
    %v114 = vsel %vm29, %v113, %v89
    %v115 = vsel %vm28, %v26, %v112
    %v116 = vsel %vm28, 0, %v114
    %v117 = vcosq.f32.pop %v115
    %v118 = vsinq.f32.pop %v115
    %vm119 = vweird.f32 %v26
    %v120 = vadd.s32 %v116, 3
    %v121 = vand.u32 %v120, 3
    %vm122 = vcmp.lt.s32.totalorder %v121, 2
    %vm123 = vcmp.eq.s32.totalorder %v121, 0
    %v124 = vxor.u32 %v118, 2147483648
    %v125 = vsel %vm123, %v117, %v124
    %vm126 = vcmp.eq.s32.totalorder %v121, 2
    %v127 = vxor.u32 %v117, 2147483648
    %v128 = vsel %vm126, %v127, %v118
    %v129 = vsel %vm122, %v125, %v128
    %v130 = vsel %vm119, nan, %v129
    %v131 = vand.u32 2147483647, %v26
    %vm132 = vcmp.le.f32.partialorder %v131, 0.7853982
    %vm133 = vcmp.lt.s32.totalorder %v26, 0
    %v134 = vand.u32 %v26, 2139095040
    %v135 = vshrl.u32 %v134, 23
    %v136 = vsub.s32 %v135, 127
    %v137 = vand.u32 2147483647, %v26
    %v138 = vand.u32 %v137, 8388607
    %v139 = vor.u32 %v138, 8388608
    %v140 = vsub.s32 0, %v139
    %v141 = vadd.s32 %v136, 1
    %vm142 = vcmp.gt.s32.totalorder %v141, 0
    %v143 = vsel %vm142, %v141, 0
    %v144 = vshrl.u32 %v143, 5
    %v145 = vand.u32 %v143, 31
    %v146 = vsub.s32 32, %v145
    %v147 = vshrl.u32 683565275, %v146
    %v148 = vshll.u32 683565275, %v145
    %v149 = vshrl.u32 2475754826, %v146
    %v150 = vor.u32 %v148, %v149
    %v151 = vshll.u32 2475754826, %v145
    %v152 = vshrl.u32 2131351028, %v146
    %v153 = vor.u32 %v151, %v152
    %v154 = vshll.u32 2131351028, %v145
    %v155 = vshrl.u32 2102212464, %v146
    %v156 = vor.u32 %v154, %v155
    %v157 = vshll.u32 2102212464, %v145
    %v158 = vshrl.u32 920167782, %v146
    %v159 = vor.u32 %v157, %v158
    %v160 = vshll.u32 920167782, %v145
    %v161 = vshrl.u32 1326507024, %v146
    %v162 = vor.u32 %v160, %v161
    %vm163 = vcmp.lt.s32.totalorder %v144, 1
    %vm164 = vcmp.lt.s32.totalorder %v144, 2
    %vm165 = vcmp.lt.s32.totalorder %v144, 3
    %vm166 = vcmp.lt.s32.totalorder %v144, 4
    %v167 = vsel %vm163, %v147, %v150
    %v168 = vsel %vm166, %v156, 2102212464
    %v169 = vsel %vm165, %v153, %v168
    %v170 = vsel %vm164, %v167, %v169
    %v171 = vsel %vm163, %v150, %v153
    %v172 = vsel %vm166, %v159, 920167782
    %v173 = vsel %vm165, %v156, %v172
    %v174 = vsel %vm164, %v171, %v173
    %v175 = vsel %vm163, %v153, %v156
    %v176 = vsel %vm166, %v162, 1326507024
    %v177 = vsel %vm165, %v159, %v176
    %v178 = vsel %vm164, %v175, %v177
    %v179 = vshll.u32 %v139, 8
    %v180 = vmul.u32.u64.compose %v179, %v178
    %v181 = vextract.low.u32 %v180
    %v182 = vextract.high.u32 %v180
    %v183 = vmul.u32.u64.compose %v179, %v174
    %v184 = vextract.low.u32 %v183
    %v185 = vextract.high.u32 %v183
    %v186 = vmul.u32 %v179, %v170
    %v187 = vadd.s32 %v182, %v184
    %vm188 = vc.u32 %v182, %v184
    %v189 = vadd.s32 %v185, 1
    %v190 = vsel %vm188, %v189, %v185
    %v191 = vadd.s32 %v186, %v190
    %v192 = vadd.s32 %v191, 536870912
    %v193 = vshrl.u32 %v192, 30
    %v194 = vshll.u32 %v193, 30
    %v195 = vsub.s32 %v191, %v194
    %vm196 = vcmp.lt.s32.totalorder %v195, 0
    %v197 = vsub.s32 0, %v195
    %v198 = vsel %vm196, %v197, %v195
    %v199 = vclz %v198
    %v200 = vsub.s32 %v199, 2
    %vm201 = vcmp.gt.s32.totalorder 0, %v200
    %v202 = vsel %vm201, 0, %v200
    %v203 = vsub.s32 32, %v202
    %v204 = vshll.u32 %v195, %v202
    %v205 = vshrl.u32 %v187, %v203
    %v206 = vor.u32 %v204, %v205
    %v207 = vsub.s32 4294967266, %v202
    %v208 = vadd.s32 %v207, 127
    %v209 = vshll.u32 %v208, 23
    %v210 = vor.u32 4788187, %v209
    %v211 = vand.u32 2147483647, %v210
    %v213 = vcvt.s32.f32 %v206
    %v214 = vmul.f32 %v213, %v211
    %v215 = vxor.u32 %v214, 2147483648
    %v216 = vsel %vm133, %v215, %v214
    %v217 = vsub.s32 4, %v193
    %v218 = vsel %vm133, %v217, %v193
    %v219 = vsel %vm132, %v26, %v216
    %v220 = vsel %vm132, 0, %v218
    %v221 = vcosq.f32.pop %v219
    %v222 = vsinq.f32.pop %v219
    %vm223 = vweird.f32 %v26
    %v224 = vand.u32 %v220, 3
    %vm225 = vcmp.lt.s32.totalorder %v224, 2
    %vm226 = vcmp.eq.s32.totalorder %v224, 0
    %v227 = vxor.u32 %v222, 2147483648
    %v228 = vsel %vm226, %v221, %v227
    %vm229 = vcmp.eq.s32.totalorder %v224, 2
    %v230 = vxor.u32 %v221, 2147483648
    %v231 = vsel %vm229, %v230, %v222
    %v232 = vsel %vm225, %v228, %v231
    %v233 = vsel %vm223, nan, %v232
    %235 = vrot.lane.b32.xlu0 %v233, 32
    %v236 = vpop.permute.xlu0 %235
    %vm238 = vcmask 261120
    %v239 = vsel %vm238, %v130, %v236
    %vm240 = vcmask 523264
    %241 = vst.msk [vmem:[#allocation2] sm:$0xff] %vm240, %v239
    // Predicated region
    $region10: #{tpu_custom_call.1} parent=1 // pred_check
      _
    $region11: #{tpu_custom_call.1} parent=1 // pred_check_branch
      %243 = sbr.rel (0) target = $region13
    $region12: #{tpu_custom_call.1} parent=1 // pred_region
      %s245 = ssub.s32 128, 128
      %246 = vsyncadd [#allocation3], %s245
      %s248 = sshll.u32 [#allocation2], 4
      %s249 = int_to_ptr.vmem [resolvable:$true] %s248
      %251 = dma.vmem_to_hbm [thread:$0]  %s249, 128, %s2, [#allocation3]
    $region13: #{tpu_custom_call.1} parent=1 // pred_fallthru
      _
    // Predicated region
    $region14: #{tpu_custom_call.1} parent=1 // pred_check
      _
    $region15: #{tpu_custom_call.1} parent=1 // pred_check_branch
      %253 = sbr.rel (0) target = $region17
    $region16: #{tpu_custom_call.1} parent=1 // pred_region
      %254 = dma.done [#allocation3], 128
    $region17: #{tpu_custom_call.1} parent=1 // pred_fallthru
      _
    %255 = vsyncpa [#allocation3], 1

</llo_original>
